<compile_context>
chip_gen: v7x
topology: tpu7x:2x2x1
jax: 0.10.0
libtpu: 0.0.40
codegen_flags: <defaults>
</compile_context>

<pallas_src>
import jax
import jax.numpy as jnp
from jax.experimental import pallas as pl
from jax.experimental.pallas import tpu as pltpu


def _dup_add_tile_kernel(s_ref, x_ref, o_ref):
    # s_ref: (1,1) SMEM scalar (== y.sum()); x_ref/o_ref: (tm, tc) VMEM tiles.
    # Each output tile is just the input tile plus the scalar; the 4x duplication is
    # expressed purely through the output index_map.
    o_ref[...] = x_ref[...] + s_ref[0, 0]


def _dup_add_small_kernel(s_ref, x_ref, o_ref):
    # Toy / misaligned fallback: whole arrays in VMEM, four slice stores (no concat).
    B, F = x_ref.shape
    v = x_ref[...] + s_ref[0, 0]
    o_ref[0:B, 0:F] = v
    o_ref[0:B, F:2 * F] = v
    o_ref[B:2 * B, 0:F] = v
    o_ref[B:2 * B, F:2 * F] = v


def model_forward(x, tm=None, tc=None):
    B, C, W = x.shape
    F = C * W
    # Contiguous row-major reshape: pure metadata, matches cat(x,x,dim=1).view(B,-1)
    # semantics (each y row is [flat(x[b]), flat(x[b])]).
    xf = x.reshape(B, F)
    dtype = x.dtype

    # y.sum() == 2 * x.sum(); computed once in the wrapper (reads x once, ~20% of the
    # kernel's total HBM traffic) and passed to the streaming kernel as an SMEM scalar.
    s = (2.0 * jnp.sum(xf, dtype=jnp.float32)).astype(dtype).reshape(1, 1)

    out_shape = jax.ShapeDtypeStruct((2 * B, 2 * F), dtype)

    # Tile selection: sublane dim a multiple of 8, lane dim a multiple of 128 (>=512 when
    # divisible) so output stores are unmasked full vst; sized well under the v7x budget.
    if tm is None:
        tm = 256 if B % 256 == 0 else (8 if B % 8 == 0 else B)
    if tc is None:
        if F % 512 == 0:
            tc = 512
        elif F % 128 == 0:
            tc = 128
        else:
            tc = F

    gridded = (B % tm == 0) and (F % tc == 0) and (tm % 8 == 0) and (tc % 128 == 0)

    if not gridded:
        # TODO(synk): for large but misaligned F, pad F up to a multiple of 128 in the
        # wrapper and slice the result, to recover lane-dense stores.
        return pl.pallas_call(
            _dup_add_small_kernel,
            out_shape=out_shape,
            in_specs=[
                pl.BlockSpec(memory_space=pltpu.MemorySpace.SMEM),
                pl.BlockSpec(memory_space=pltpu.MemorySpace.VMEM),
            ],
            out_specs=pl.BlockSpec(memory_space=pltpu.MemorySpace.VMEM),
        )(s, xf)

    nB, nF = B // tm, F // tc
    # Dup axes innermost: the input block index (i, j) is unchanged across them, so the
    # input tile is fetched once and written to 4 output positions.
    grid = (nB, nF, 2, 2)

    itemsize = jnp.dtype(dtype).itemsize
    cost = pl.CostEstimate(
        flops=B * F,                                   # one add per input element (x4 dup)
        transcendentals=0,
        bytes_accessed=(B * F + 4 * B * F) * itemsize,  # read x once, write 4x
    )

    return pl.pallas_call(
        _dup_add_tile_kernel,
        out_shape=out_shape,
        grid=grid,
        in_specs=[
            pl.BlockSpec(memory_space=pltpu.MemorySpace.SMEM),          # scalar s
            pl.BlockSpec((tm, tc), lambda i, j, d0, d1: (i, j)),        # x tile
        ],
        out_specs=pl.BlockSpec(
            (tm, tc),
            lambda i, j, d0, d1: (d0 * nB + i, d1 * nF + j),            # 4x duplication
        ),
        compiler_params=pltpu.CompilerParams(
            dimension_semantics=("parallel", "parallel", "arbitrary", "arbitrary"),
        ),
        cost_estimate=cost,
    )(s, xf)


if __name__ == "__main__":
    def reference(x):
        a = jnp.concatenate([x, x], axis=1)            # (B, 2C, W)
        y = a.reshape(a.shape[0], -1)                  # (B, 2C*W)
        z = jnp.concatenate([y, y], axis=0)            # (2B, 2C*W)
        return z + jnp.sum(y)

    # 1) Toy shape from the torch spec (exercises the misaligned fallback path).
    x_small = jax.random.normal(jax.random.PRNGKey(0), (2, 3, 4), dtype=jnp.float32)
    out_small = jax.block_until_ready(model_forward(x_small))
    assert out_small.shape == (4, 24), out_small.shape
    assert jnp.allclose(out_small, reference(x_small), atol=1e-5, rtol=1e-5)

    # 2) Aligned shape (exercises the gridded, lane-dense streaming path).
    x_big = jax.random.normal(jax.random.PRNGKey(1), (16, 8, 128), dtype=jnp.float32)
    out_big = jax.block_until_ready(model_forward(x_big))
    assert out_big.shape == (32, 2048), out_big.shape
    assert jnp.allclose(out_big, reference(x_big), atol=1e-3, rtol=1e-4)

    print("KERNEL_OK")
</pallas_src>

<mosaic_0001>
module attributes {stable_mosaic.version = 11 : i64} {
  func.func @_dup_add_small_kernel(%arg0: memref<1x1xf32, #tpu.memory_space<smem>>, %arg1: memref<2x12xf32, #tpu.memory_space<vmem>>, %arg2: memref<4x24xf32, #tpu.memory_space<vmem>>) attributes {dimension_semantics = [], scalar_prefetch = 0 : i64, scratch_operands = 0 : i64, tpu.core_type = #tpu.core_type<tc>} {
    %c0 = arith.constant 0 : index
    %c0_0 = arith.constant 0 : index
    %0 = vector.load %arg1[%c0, %c0_0] : memref<2x12xf32, #tpu.memory_space<vmem>>, vector<2x12xf32>
    %c0_1 = arith.constant 0 : index
    %c0_2 = arith.constant 0 : index
    %1 = memref.load %arg0[%c0_1, %c0_2] : memref<1x1xf32, #tpu.memory_space<smem>>
    %2 = vector.broadcast %1 : f32 to vector<2x12xf32>
    %3 = arith.addf %0, %2 : vector<2x12xf32>
    %c0_3 = arith.constant 0 : index
    %c0_4 = arith.constant 0 : index
    %4 = vector.load %arg2[%c0_3, %c0_4] : memref<4x24xf32, #tpu.memory_space<vmem>>, vector<2x12xf32>
    tpu.vector_store %arg2[%c0_3, %c0_4], %3 {strides = array<i32>} : memref<4x24xf32, #tpu.memory_space<vmem>>, vector<2x12xf32>,
    %c0_5 = arith.constant 0 : index
    %c12 = arith.constant 12 : index
    %5 = vector.load %arg2[%c0_5, %c12] : memref<4x24xf32, #tpu.memory_space<vmem>>, vector<2x12xf32>
    tpu.vector_store %arg2[%c0_5, %c12], %3 {strides = array<i32>} : memref<4x24xf32, #tpu.memory_space<vmem>>, vector<2x12xf32>,
    %c2 = arith.constant 2 : index
    %c0_6 = arith.constant 0 : index
    %6 = vector.load %arg2[%c2, %c0_6] : memref<4x24xf32, #tpu.memory_space<vmem>>, vector<2x12xf32>
    tpu.vector_store %arg2[%c2, %c0_6], %3 {strides = array<i32>} : memref<4x24xf32, #tpu.memory_space<vmem>>, vector<2x12xf32>,
    %c2_7 = arith.constant 2 : index
    %c12_8 = arith.constant 12 : index
    %7 = vector.load %arg2[%c2_7, %c12_8] : memref<4x24xf32, #tpu.memory_space<vmem>>, vector<2x12xf32>
    tpu.vector_store %arg2[%c2_7, %c12_8], %3 {strides = array<i32>} : memref<4x24xf32, #tpu.memory_space<vmem>>, vector<2x12xf32>,
    return
  }
}

</mosaic_0001>

<llo_original>
// kernel: tpu_custom_call.1
$region0: #{tpu_custom_call.1}
  #allocation0 [shape = 'u32[]', space=smem, size = 0x4, offset = 0x4, fixed_abs, tag = 'smem constant byte address 0x4 - core index']
  #allocation1 [shape = 'u32[144,128]{1,0:T(1,128)}', space=vmem, size = 0x12000, scoped, tag = 'internal scratch']
  #allocation2 [shape = 'f32[1,1]{1,0:T(1,128)S(6)}', space=smem, size = 0x200, scoped, tag = 'scoped memory for tpu_custom_call.1']
  %s0 = inlined_call_operand.<no memory space> [shape: f32[1,1], index: 0, kind: input, shape index: {}]
  %s1 = inlined_call_operand.vmem [shape: f32[2,12], index: 1, kind: input, shape index: {}]
  %s2 = inlined_call_operand.hbm [shape: f32[4,24], index: 2, kind: output, shape index: {}]
  %s3 = sld [smem:[#allocation0]]
  $region18: #{tpu_custom_call.1} parent=0
    _
  %s5 = ssub.s32 1, %s3
  %s6 = scalar_select 0, %s5, %s3
  %7 = sst [smem:[#allocation2]] %s0
  $region1: #{tpu_custom_call.1} parent=0
    #allocation3 [shape = 'u8[2048]{0}', space=vmem, size = 0x800, scoped, tag = 'output window, operand 0, single buffered']
    #allocation4 [shape = 's32[1]{0}', space=sflag, size = 0x4, scoped, tag = 'scoped memory for tpu_custom_call.1']
    %8 = vsyncpa [#allocation4], 0
    // Predicated region
    $region2: #{tpu_custom_call.1} parent=1 // pred_check
      _
    $region3: #{tpu_custom_call.1} parent=1 // pred_check_branch
      %10 = sbr.rel (0) target = $region5
    $region4: #{tpu_custom_call.1} parent=1 // pred_region
      _
    $region5: #{tpu_custom_call.1} parent=1 // pred_fallthru
      _
    // Predicated region
    $region6: #{tpu_custom_call.1} parent=1 // pred_check
      _
    $region7: #{tpu_custom_call.1} parent=1 // pred_check_branch
      %12 = sbr.rel (0) target = $region9
    $region8: #{tpu_custom_call.1} parent=1 // pred_region
      _
    $region9: #{tpu_custom_call.1} parent=1 // pred_fallthru
      _
    %v13 = vld [vmem:[%s1] sm:$0x3]
    %s14 = sld [smem:[#allocation2]]
    %v15 = vstv %s14
    %v16 = vadd.f32 %v13, %v15
    %vm17 = vcmask 91136
    %18 = vst.msk [vmem:[#allocation3] sm:$0x3] %vm17, %v16
    %20 = vrot.lane.b32.xlu0 %v16, 12
    %v21 = vpop.permute.xlu0 %20
    %vm23 = vcmask 189536
    %24 = vst.msk [vmem:[#allocation3] sm:$0x3] %vm23, %v21
    %25 = vst.msk [vmem:[#allocation3 + $0x2] sm:$0x3] %vm17, %v16
    %26 = vst.msk [vmem:[#allocation3 + $0x2] sm:$0x3] %vm23, %v21
    // Predicated region
    $region10: #{tpu_custom_call.1} parent=1 // pred_check
      _
    $region11: #{tpu_custom_call.1} parent=1 // pred_check_branch
      %28 = sbr.rel (0) target = $region13
    $region12: #{tpu_custom_call.1} parent=1 // pred_region
      %s30 = ssub.s32 64, 64
      %31 = vsyncadd [#allocation4], %s30
      %s33 = sshll.u32 [#allocation3], 4
      %s34 = int_to_ptr.vmem [resolvable:$true] %s33
      %36 = dma.vmem_to_hbm [thread:$0]  %s34, 64, %s2, [#allocation4]
    $region13: #{tpu_custom_call.1} parent=1 // pred_fallthru
      _
    // Predicated region
    $region14: #{tpu_custom_call.1} parent=1 // pred_check
      _
    $region15: #{tpu_custom_call.1} parent=1 // pred_check_branch
      %38 = sbr.rel (0) target = $region17
    $region16: #{tpu_custom_call.1} parent=1 // pred_region
      %39 = dma.done [#allocation4], 64
    $region17: #{tpu_custom_call.1} parent=1 // pred_fallthru
      _
    %40 = vsyncpa [#allocation4], 1

</llo_original>
